<compile_context>
chip_gen: v7x
topology: tpu7x:2x2x1
jax: 0.10.0
libtpu: 0.0.40
codegen_flags: <defaults>
</compile_context>

<pallas_src>
import jax
import jax.numpy as jnp
from jax.experimental import pallas as pl
from jax.experimental.pallas import tpu as pltpu


def _round_up(x, mult):
    return (x + mult - 1) // mult * mult


def _make_root_kernel(n_children, residual):
    """Kernel: out = ReLU(sum_i child_i @ W_i + bias [+ child_0])."""

    def kernel(*refs):
        child_refs = refs[:n_children]
        w_refs = refs[n_children:2 * n_children]
        bias_ref = refs[2 * n_children]
        o_ref = refs[2 * n_children + 1]

        # 1x1 conv over the (virtual) channel concat == sum of per-child
        # matmuls on the MXU, accumulated in f32.
        acc = jnp.dot(child_refs[0][...], w_refs[0][...],
                      preferred_element_type=jnp.float32)
        for c_ref, w_ref in zip(child_refs[1:], w_refs[1:]):
            acc = acc + jnp.dot(c_ref[...], w_ref[...],
                                preferred_element_type=jnp.float32)

        # folded inference BatchNorm (scale already inside W): bias only.
        acc = acc + bias_ref[...]

        if residual:
            # children[0] block is already resident in VMEM (it fed the first
            # matmul) — reuse it, no second HBM stream.
            acc = acc + child_refs[0][...].astype(jnp.float32)

        o_ref[...] = jnp.maximum(acc, 0.0).astype(o_ref.dtype)

    return kernel


def root_forward_nhwc(children, conv_w, bn_gamma, bn_beta, bn_mean, bn_var,
                      *, residual=True, eps=1e-5, tile_m=1024):
    """Root.forward on channels-last inputs.

    children : list of (N, H, W, Ci) arrays.
    conv_w   : (Cout, Cin, 1, 1) conv weight (no bias), Cin = sum(Ci).
    bn_*     : BatchNorm2d params / running stats, shape (Cout,).
    """
    n, h, w = children[0].shape[:3]
    m = n * h * w
    child_c = [int(c.shape[-1]) for c in children]
    cin = sum(child_c)
    cout = int(conv_w.shape[0])
    assert int(conv_w.shape[1]) == cin
    if residual:
        assert child_c[0] == cout, "residual requires children[0] to have Cout channels"
    out_dtype = children[0].dtype

    # ---- fold inference BN into the conv weight + a bias ----
    scale = (bn_gamma.astype(jnp.float32) /
             jnp.sqrt(bn_var.astype(jnp.float32) + eps))
    bias = bn_beta.astype(jnp.float32) - bn_mean.astype(jnp.float32) * scale
    w_full = conv_w.reshape(cout, cin).T.astype(jnp.float32) * scale[None, :]  # (Cin, Cout)

    # ---- lane-dense output: pad Cout to a multiple of 128 ----
    cout_pad = _round_up(cout, 128)
    pad_c = cout_pad - cout
    if pad_c:
        w_full = jnp.pad(w_full, ((0, 0), (0, pad_c)))
        bias = jnp.pad(bias, (0, pad_c))
    bias2d = bias.reshape(1, cout_pad)

    # per-child weight row slices (replaces the channel concat)
    w_slices = []
    off = 0
    for c in child_c:
        w_slices.append(w_full[off:off + c, :])
        off += c

    # flatten children to (M, Ci)
    flats = [c.reshape(m, c.shape[-1]) for c in children]

    # If Cout was padded and we need the residual, pad children[0]'s channels
    # (and its weight rows with zeros) so the in-kernel add is shape-aligned.
    if residual and pad_c:
        flats[0] = jnp.pad(flats[0], ((0, 0), (0, pad_c)))
        w_slices[0] = jnp.pad(w_slices[0], ((0, pad_c), (0, 0)))
        child_c[0] = cout_pad

    # ---- tiling: big M tiles, padded M, VMEM-budgeted per generation ----
    tile_m = max(8, min(int(tile_m), _round_up(m, 8)))
    tile_m = _round_up(tile_m, 8)

    try:
        vmem_cap = int(pltpu.get_tpu_info().vmem_capacity_bytes)
    except Exception:  # pragma: no cover - fall back to the smallest (v7x)
        vmem_cap = 64 * 1024 * 1024
    vmem_budget = int(vmem_cap * 0.7)

    def _vmem_need(tm):
        stream = (sum(child_c) + cout_pad) * 4 * tm          # in+out tile bytes
        weights = (sum(child_c) * cout_pad + cout_pad) * 4   # W slices + bias
        return 2 * stream + 2 * weights                      # double-buffered

    while tile_m > 256 and _vmem_need(tile_m) > vmem_budget:
        tile_m //= 2

    m_pad = _round_up(m, tile_m)
    if m_pad != m:
        flats = [jnp.pad(f, ((0, m_pad - m), (0, 0))) for f in flats]

    grid = (m_pad // tile_m,)
    nch = len(flats)

    in_specs = (
        [pl.BlockSpec((tile_m, c), lambda i: (i, 0)) for c in child_c]
        + [pl.BlockSpec((c, cout_pad), lambda i: (0, 0)) for c in child_c]
        + [pl.BlockSpec((1, cout_pad), lambda i: (0, 0))]
    )
    out_spec = pl.BlockSpec((tile_m, cout_pad), lambda i: (i, 0))

    # mem-bound: give XLA an honest cost hint
    itemsize = jnp.dtype(out_dtype).itemsize
    flops = 2 * m_pad * sum(child_c) * cout_pad
    bytes_accessed = (sum(m_pad * c * itemsize for c in child_c)      # children
                      + sum(c * cout_pad * 4 for c in child_c)        # weights
                      + cout_pad * 4                                  # bias
                      + m_pad * cout_pad * itemsize)                  # output

    out = pl.pallas_call(
        _make_root_kernel(nch, residual),
        out_shape=jax.ShapeDtypeStruct((m_pad, cout_pad), out_dtype),
        grid_spec=pltpu.PrefetchScalarGridSpec(
            num_scalar_prefetch=0,
            grid=grid,
            in_specs=in_specs,
            out_specs=out_spec,
        ),
        compiler_params=pltpu.CompilerParams(
            dimension_semantics=("parallel",),   # shards across v7x's 2 TCs
            vmem_limit_bytes=vmem_budget,
        ),
        cost_estimate=pl.CostEstimate(flops=flops, transcendentals=0,
                                      bytes_accessed=bytes_accessed),
    )(*flats, *w_slices, bias2d)

    out = out[:m, :cout]                     # drop M / Cout padding (fuses)
    return out.reshape(n, h, w, cout)


def root_forward(children_nchw, conv_w, bn_gamma, bn_beta, bn_mean, bn_var,
                 *, residual=True, eps=1e-5, tile_m=1024):
    """PyTorch-convention (NCHW) wrapper around the NHWC core.

    In a full model, keep activations NHWC end-to-end and call
    root_forward_nhwc directly — these transposes exist only for parity with
    the NCHW reference.
    """
    children_nhwc = [jnp.transpose(c, (0, 2, 3, 1)) for c in children_nchw]
    y = root_forward_nhwc(children_nhwc, conv_w, bn_gamma, bn_beta, bn_mean,
                          bn_var, residual=residual, eps=eps, tile_m=tile_m)
    return jnp.transpose(y, (0, 3, 1, 2))


def _reference(children_nchw, conv_w, bn_gamma, bn_beta, bn_mean, bn_var,
               *, residual=True, eps=1e-5):
    x = jnp.concatenate(children_nchw, axis=1)                      # NCHW
    w_mat = conv_w.reshape(conv_w.shape[0], conv_w.shape[1])
    y = jnp.einsum('nchw,oc->nohw', x, w_mat)
    scale = bn_gamma / jnp.sqrt(bn_var + eps)
    bias = bn_beta - bn_mean * scale
    y = y * scale[None, :, None, None] + bias[None, :, None, None]
    if residual:
        y = y + children_nchw[0]
    return jnp.maximum(y, 0.0)


if __name__ == "__main__":
    # Root(in_channels=32, out_channels=16, kernel_size=1, residual=True)
    N, H, W = 2, 8, 8
    C1, C2 = 16, 16          # children channel counts; C1 == out_channels
    CIN, COUT = C1 + C2, 16

    key = jax.random.PRNGKey(0)
    k1, k2, k3, k4, k5, k6, k7 = jax.random.split(key, 7)

    x1 = jax.random.normal(k1, (N, C1, H, W), dtype=jnp.float32)
    x2 = jax.random.normal(k2, (N, C2, H, W), dtype=jnp.float32)

    conv_w = jax.random.normal(k3, (COUT, CIN, 1, 1), dtype=jnp.float32) * 0.1
    bn_gamma = 1.0 + 0.1 * jax.random.normal(k4, (COUT,), dtype=jnp.float32)
    bn_beta = 0.1 * jax.random.normal(k5, (COUT,), dtype=jnp.float32)
    bn_mean = 0.1 * jax.random.normal(k6, (COUT,), dtype=jnp.float32)
    bn_var = jnp.abs(jax.random.normal(k7, (COUT,), dtype=jnp.float32)) + 0.5

    out = root_forward([x1, x2], conv_w, bn_gamma, bn_beta, bn_mean, bn_var,
                       residual=True)
    out = jax.block_until_ready(out)

    ref = _reference([x1, x2], conv_w, bn_gamma, bn_beta, bn_mean, bn_var,
                     residual=True)
    assert out.shape == (N, COUT, H, W)
    assert jnp.allclose(out, ref, atol=1e-3, rtol=1e-3), "mismatch vs reference"

    # also exercise the no-residual path once
    out_nr = root_forward([x1, x2], conv_w, bn_gamma, bn_beta, bn_mean, bn_var,
                          residual=False)
    out_nr = jax.block_until_ready(out_nr)
    ref_nr = _reference([x1, x2], conv_w, bn_gamma, bn_beta, bn_mean, bn_var,
                        residual=False)
    assert jnp.allclose(out_nr, ref_nr, atol=1e-3, rtol=1e-3), "mismatch (no residual)"

    print("KERNEL_OK")
</pallas_src>

<mosaic_0001>
module attributes {stable_mosaic.version = 11 : i64} {
  func.func @kernel(%arg0: i32, %arg1: memref<128x128xf32, #tpu.memory_space<vmem>>, %arg2: memref<128x16xf32, #tpu.memory_space<vmem>>, %arg3: memref<128x128xf32, #tpu.memory_space<vmem>>, %arg4: memref<16x128xf32, #tpu.memory_space<vmem>>, %arg5: memref<1x128xf32, #tpu.memory_space<vmem>>, %arg6: memref<128x128xf32, #tpu.memory_space<vmem>>) attributes {dimension_semantics = [#tpu.dimension_semantics<parallel>], iteration_bounds = array<i64: 1>, scalar_prefetch = 0 : i64, scratch_operands = 0 : i64, tpu.core_type = #tpu.core_type<tc>, window_params = [{transform_indices = @transform_0, window_bounds = array<i64: 128, 128>}, {transform_indices = @transform_1, window_bounds = array<i64: 128, 16>}, {pipeline_mode = #tpu.pipeline_mode<synchronous>, transform_indices = @transform_2, window_bounds = array<i64: 128, 128>}, {pipeline_mode = #tpu.pipeline_mode<synchronous>, transform_indices = @transform_3, window_bounds = array<i64: 16, 128>}, {pipeline_mode = #tpu.pipeline_mode<synchronous>, transform_indices = @transform_4, window_bounds = array<i64: 1, 128>}, {transform_indices = @transform_5, window_bounds = array<i64: 128, 128>}]} {
    %c0 = arith.constant 0 : index
    %c0_0 = arith.constant 0 : index
    %0 = vector.load %arg1[%c0, %c0_0] : memref<128x128xf32, #tpu.memory_space<vmem>>, vector<128x128xf32>
    %c0_1 = arith.constant 0 : index
    %c0_2 = arith.constant 0 : index
    %1 = vector.load %arg3[%c0_1, %c0_2] : memref<128x128xf32, #tpu.memory_space<vmem>>, vector<128x128xf32>
    %cst = arith.constant dense<0.000000e+00> : vector<128x128xf32>
    %2 = tpu.matmul %0, %1, %cst {dimension_numbers = #tpu.dot_dimension_numbers<[1], [0], [0], [1], [0, 0, 1, 1], [], []>} : vector<128x128xf32>, vector<128x128xf32>, vector<128x128xf32> -> vector<128x128xf32>
    %c0_3 = arith.constant 0 : index
    %c0_4 = arith.constant 0 : index
    %3 = vector.load %arg2[%c0_3, %c0_4] : memref<128x16xf32, #tpu.memory_space<vmem>>, vector<128x16xf32>
    %c0_5 = arith.constant 0 : index
    %c0_6 = arith.constant 0 : index
    %4 = vector.load %arg4[%c0_5, %c0_6] : memref<16x128xf32, #tpu.memory_space<vmem>>, vector<16x128xf32>
    %cst_7 = arith.constant dense<0.000000e+00> : vector<128x128xf32>
    %5 = tpu.matmul %3, %4, %cst_7 {dimension_numbers = #tpu.dot_dimension_numbers<[1], [0], [0], [1], [0, 0, 1, 1], [], []>} : vector<128x16xf32>, vector<16x128xf32>, vector<128x128xf32> -> vector<128x128xf32>
    %6 = arith.addf %2, %5 : vector<128x128xf32>
    %c0_8 = arith.constant 0 : index
    %c0_9 = arith.constant 0 : index
    %7 = vector.load %arg5[%c0_8, %c0_9] : memref<1x128xf32, #tpu.memory_space<vmem>>, vector<1x128xf32>
    %8 = vector.broadcast %7 : vector<1x128xf32> to vector<128x128xf32>
    %9 = arith.addf %6, %8 : vector<128x128xf32>
    %c0_10 = arith.constant 0 : index
    %c0_11 = arith.constant 0 : index
    %10 = vector.load %arg1[%c0_10, %c0_11] : memref<128x128xf32, #tpu.memory_space<vmem>>, vector<128x128xf32>
    %11 = arith.addf %9, %10 : vector<128x128xf32>
    %cst_12 = arith.constant 0.000000e+00 : f32
    %12 = vector.broadcast %cst_12 : f32 to vector<128x128xf32>
    %13 = arith.maximumf %11, %12 : vector<128x128xf32>
    %c0_13 = arith.constant 0 : index
    %c0_14 = arith.constant 0 : index
    %14 = vector.load %arg6[%c0_13, %c0_14] : memref<128x128xf32, #tpu.memory_space<vmem>>, vector<128x128xf32>
    tpu.vector_store %arg6[%c0_13, %c0_14], %13 {strides = array<i32>} : memref<128x128xf32, #tpu.memory_space<vmem>>, vector<128x128xf32>,
    return
  }
  func.func @transform_0(%arg0: i32) -> (i32, i32) {
    %c0_i32 = arith.constant 0 : i32
    %c0_i32_0 = arith.constant 0 : i32
    return %arg0, %c0_i32 : i32, i32
  }
  func.func @transform_1(%arg0: i32) -> (i32, i32) {
    %c0_i32 = arith.constant 0 : i32
    %c0_i32_0 = arith.constant 0 : i32
    return %arg0, %c0_i32 : i32, i32
  }
  func.func @transform_2(%arg0: i32) -> (i32, i32) {
    %c0_i32 = arith.constant 0 : i32
    %c0_i32_0 = arith.constant 0 : i32
    %c0_i32_1 = arith.constant 0 : i32
    return %c0_i32, %c0_i32_0 : i32, i32
  }
  func.func @transform_3(%arg0: i32) -> (i32, i32) {
    %c0_i32 = arith.constant 0 : i32
    %c0_i32_0 = arith.constant 0 : i32
    %c0_i32_1 = arith.constant 0 : i32
    return %c0_i32, %c0_i32_0 : i32, i32
  }
  func.func @transform_4(%arg0: i32) -> (i32, i32) {
    %c0_i32 = arith.constant 0 : i32
    %c0_i32_0 = arith.constant 0 : i32
    %c0_i32_1 = arith.constant 0 : i32
    return %c0_i32, %c0_i32_0 : i32, i32
  }
  func.func @transform_5(%arg0: i32) -> (i32, i32) {
    %c0_i32 = arith.constant 0 : i32
    %c0_i32_0 = arith.constant 0 : i32
    return %arg0, %c0_i32 : i32, i32
  }
}

</mosaic_0001>

<llo_original>
// kernel: tpu_custom_call.1
$region0: #{tpu_custom_call.1}
  #allocation0 [shape = 'u32[]', space=smem, size = 0x4, offset = 0x4, fixed_abs, tag = 'smem constant byte address 0x4 - core index']
  #allocation1 [shape = 'u32[144,128]{1,0:T(1,128)}', space=vmem, size = 0x12000, scoped, tag = 'internal scratch']
  %s0 = inlined_call_operand.vmem [shape: f32[128,128], index: 0, kind: input, shape index: {}]
  %s1 = inlined_call_operand.vmem [shape: f32[128,16], index: 1, kind: input, shape index: {}]
  %s2 = inlined_call_operand.hbm [shape: f32[128,128], index: 2, kind: input, shape index: {}]
  %s3 = inlined_call_operand.vmem [shape: f32[16,128], index: 3, kind: input, shape index: {}]
  %s4 = inlined_call_operand.vmem [shape: f32[1,128], index: 4, kind: input, shape index: {}]
  %s5 = inlined_call_operand.hbm [shape: f32[128,128], index: 5, kind: output, shape index: {}]
  %s6 = sld [smem:[#allocation0]]
  $region34: #{tpu_custom_call.1} parent=0
    _
  %s8 = ssub.s32 1, %s6
  %s9 = scalar_select 0, %s8, %s6
  $region1: #{tpu_custom_call.1} parent=0
    #allocation2 [shape = 'u8[65536]{0}', space=vmem, size = 0x10000, scoped, tag = 'input window, operand 2, single buffered']
    #allocation3 [shape = 's32[1]{0}', space=sflag, size = 0x4, scoped, tag = 'scoped memory for tpu_custom_call.1']
    #allocation4 [shape = 's32[1]{0}', space=sflag, size = 0x4, scoped, tag = 'scoped memory for tpu_custom_call.1']
    #allocation5 [shape = 'u8[65536]{0}', space=vmem, size = 0x10000, scoped, tag = 'output window, operand 0, single buffered']
    %10 = vsyncpa [#allocation3], 0
    %11 = vsyncpa [#allocation4], 0
    // Predicated region
    $region2: #{tpu_custom_call.1} parent=1 // pred_check
      _
    $region3: #{tpu_custom_call.1} parent=1 // pred_check_branch
      %13 = sbr.rel (0) target = $region5
    $region4: #{tpu_custom_call.1} parent=1 // pred_region
      _
    $region5: #{tpu_custom_call.1} parent=1 // pred_fallthru
      _
    // Predicated region
    $region6: #{tpu_custom_call.1} parent=1 // pred_check
      _
    $region7: #{tpu_custom_call.1} parent=1 // pred_check_branch
      %15 = sbr.rel (0) target = $region9
    $region8: #{tpu_custom_call.1} parent=1 // pred_region
      _
    $region9: #{tpu_custom_call.1} parent=1 // pred_fallthru
      _
    // Predicated region
    $region10: #{tpu_custom_call.1} parent=1 // pred_check
      _
    $region11: #{tpu_custom_call.1} parent=1 // pred_check_branch
      %17 = sbr.rel (0) target = $region13
    $region12: #{tpu_custom_call.1} parent=1 // pred_region
      %s19 = ssub.s32 2048, 2048
      %20 = vsyncadd [#allocation3], %s19
      %s21 = sshll.u32 [#allocation2], 4
      %s22 = int_to_ptr.vmem [resolvable:$true] %s21
      %27 = dma.hbm_to_vmem [thread:$0]  %s2, 2048, %s22, [#allocation3], 128, 128, 8
    $region13: #{tpu_custom_call.1} parent=1 // pred_fallthru
      _
    // Predicated region
    $region14: #{tpu_custom_call.1} parent=1 // pred_check
      _
    $region15: #{tpu_custom_call.1} parent=1 // pred_check_branch
      %29 = sbr.rel (0) target = $region17
    $region16: #{tpu_custom_call.1} parent=1 // pred_region
      _
    $region17: #{tpu_custom_call.1} parent=1 // pred_fallthru
      _
    // Predicated region
    $region18: #{tpu_custom_call.1} parent=1 // pred_check
      _
    $region19: #{tpu_custom_call.1} parent=1 // pred_check_branch
      %31 = sbr.rel (0) target = $region21
    $region20: #{tpu_custom_call.1} parent=1 // pred_region
      _
    $region21: #{tpu_custom_call.1} parent=1 // pred_fallthru
      _
    // Predicated region
    $region22: #{tpu_custom_call.1} parent=1 // pred_check
      _
    $region23: #{tpu_custom_call.1} parent=1 // pred_check_branch
      %33 = sbr.rel (0) target = $region25
    $region24: #{tpu_custom_call.1} parent=1 // pred_region
      %34 = dma.done [#allocation3], 2048
    $region25: #{tpu_custom_call.1} parent=1 // pred_fallthru
      _
    %v35 = vld [vmem:[%s0] sm:$0xff]
    %v36 = vld [vmem:[%s0 + $0x8] sm:$0xff]
    %v37 = vld [vmem:[%s0 + $0x10] sm:$0xff]
    %v38 = vld [vmem:[%s0 + $0x18] sm:$0xff]
    %v39 = vld [vmem:[%s0 + $0x20] sm:$0xff]
    %v40 = vld [vmem:[%s0 + $0x28] sm:$0xff]
    %v41 = vld [vmem:[%s0 + $0x30] sm:$0xff]
    %v42 = vld [vmem:[%s0 + $0x38] sm:$0xff]
    %v43 = vld [vmem:[%s0 + $0x40] sm:$0xff]
    %v44 = vld [vmem:[%s0 + $0x48] sm:$0xff]
    %v45 = vld [vmem:[%s0 + $0x50] sm:$0xff]
    %v46 = vld [vmem:[%s0 + $0x58] sm:$0xff]
    %v47 = vld [vmem:[%s0 + $0x60] sm:$0xff]
    %v48 = vld [vmem:[%s0 + $0x68] sm:$0xff]
    %v49 = vld [vmem:[%s0 + $0x70] sm:$0xff]
    %v50 = vld [vmem:[%s0 + $0x78] sm:$0xff]
    %v51 = vld [vmem:[#allocation2] sm:$0xff]
    %v52 = vld [vmem:[#allocation2 + $0x8] sm:$0xff]
    %v53 = vld [vmem:[#allocation2 + $0x10] sm:$0xff]
    %v54 = vld [vmem:[#allocation2 + $0x18] sm:$0xff]
    %v55 = vld [vmem:[#allocation2 + $0x20] sm:$0xff]
    %v56 = vld [vmem:[#allocation2 + $0x28] sm:$0xff]
    %v57 = vld [vmem:[#allocation2 + $0x30] sm:$0xff]
    %v58 = vld [vmem:[#allocation2 + $0x38] sm:$0xff]
    %v59 = vld [vmem:[#allocation2 + $0x40] sm:$0xff]
    %v60 = vld [vmem:[#allocation2 + $0x48] sm:$0xff]
    %v61 = vld [vmem:[#allocation2 + $0x50] sm:$0xff]
    %v62 = vld [vmem:[#allocation2 + $0x58] sm:$0xff]
    %v63 = vld [vmem:[#allocation2 + $0x60] sm:$0xff]
    %v64 = vld [vmem:[#allocation2 + $0x68] sm:$0xff]
    %v65 = vld [vmem:[#allocation2 + $0x70] sm:$0xff]
    %v66 = vld [vmem:[#allocation2 + $0x78] sm:$0xff]
    %v67 = vld [vmem:[%s1] sm:$0xff]
    %v68 = vld [vmem:[%s1 + $0x8] sm:$0xff]
    %v69 = vld [vmem:[%s1 + $0x10] sm:$0xff]
    %v70 = vld [vmem:[%s1 + $0x18] sm:$0xff]
    %v71 = vld [vmem:[%s1 + $0x20] sm:$0xff]
    %v72 = vld [vmem:[%s1 + $0x28] sm:$0xff]
    %v73 = vld [vmem:[%s1 + $0x30] sm:$0xff]
    %v74 = vld [vmem:[%s1 + $0x38] sm:$0xff]
    %v75 = vld [vmem:[%s1 + $0x40] sm:$0xff]
    %v76 = vld [vmem:[%s1 + $0x48] sm:$0xff]
    %v77 = vld [vmem:[%s1 + $0x50] sm:$0xff]
    %v78 = vld [vmem:[%s1 + $0x58] sm:$0xff]
    %v79 = vld [vmem:[%s1 + $0x60] sm:$0xff]
    %v80 = vld [vmem:[%s1 + $0x68] sm:$0xff]
    %v81 = vld [vmem:[%s1 + $0x70] sm:$0xff]
    %v82 = vld [vmem:[%s1 + $0x78] sm:$0xff]
    %v83 = vld [vmem:[%s3] sm:$0xff]
    %v84 = vld [vmem:[%s3 + $0x8] sm:$0xff]
    %vm85 = vcmask 130048
    %v87 = vsel %vm85, %v67, 0
    %v90 = vsel %vm85, %v68, 0
    %v93 = vsel %vm85, %v69, 0
    %v96 = vsel %vm85, %v70, 0
    %v99 = vsel %vm85, %v71, 0
    %v102 = vsel %vm85, %v72, 0
    %v105 = vsel %vm85, %v73, 0
    %v108 = vsel %vm85, %v74, 0
    %v111 = vsel %vm85, %v75, 0
    %v114 = vsel %vm85, %v76, 0
    %v117 = vsel %vm85, %v77, 0
    %v120 = vsel %vm85, %v78, 0
    %v123 = vsel %vm85, %v79, 0
    %v126 = vsel %vm85, %v80, 0
    %v129 = vsel %vm85, %v81, 0
    %v132 = vsel %vm85, %v82, 0
    %134 = vmatprep.subr.mxu0 0.0
    %135 = vmatpush1.msra.mxu0 %v83
    %136 = vmatprep.subr.mxu0 0.0
    %137 = vmatpush1.msra.mxu0 %v84
    %138 = vmatprep.subr.mxu0 0.0
    %139 = vmatpush1.msra.mxu0 0.0
    %140 = vmatprep.subr.mxu0 0.0
    %141 = vmatpush1.msra.mxu0 0.0
    %142 = vmatprep.subr.mxu0 0.0
    %143 = vmatpush1.msra.mxu0 0.0
    %144 = vmatprep.subr.mxu0 0.0
    %145 = vmatpush1.msra.mxu0 0.0
    %146 = vmatprep.subr.mxu0 0.0
    %147 = vmatpush1.msra.mxu0 0.0
    %148 = vmatprep.subr.mxu0 0.0
    %149 = vmatpush1.msra.mxu0 0.0
    %150 = vmatprep.subr.mxu0 0.0
    %151 = vmatpush1.msra.mxu0 0.0
    %152 = vmatprep.subr.mxu0 0.0
    %153 = vmatpush1.msra.mxu0 0.0
    %154 = vmatprep.subr.mxu0 0.0
    %155 = vmatpush1.msra.mxu0 0.0
    %156 = vmatprep.subr.mxu0 0.0
    %157 = vmatpush1.msra.mxu0 0.0
    %158 = vmatprep.subr.mxu0 0.0
    %159 = vmatpush1.msra.mxu0 0.0
    %160 = vmatprep.subr.mxu0 0.0
    %161 = vmatpush1.msra.mxu0 0.0
    %162 = vmatprep.subr.mxu0 0.0
    %163 = vmatpush1.msra.mxu0 0.0
    %164 = vmatprep.subr.mxu0 0.0
    %165 = vmatpush1.msra.mxu0 0.0
    %166 = vmatprep.subr.mxu0 0.0
    %167 = vmatpush1.msra.mxu0 0.0
    %168 = vmatprep.subr.mxu0 0.0
    %169 = vmatpush1.msra.mxu0 0.0
    %170 = vmatprep.subr.mxu0 0.0
    %171 = vmatpush1.msra.mxu0 0.0
    %172 = vmatprep.subr.mxu0 0.0
    %173 = vmatpush1.msra.mxu0 0.0
    %174 = vmatprep.subr.mxu0 0.0
    %175 = vmatpush1.msra.mxu0 0.0
    %176 = vmatprep.subr.mxu0 0.0
    %177 = vmatpush1.msra.mxu0 0.0
    %178 = vmatprep.subr.mxu0 0.0
    %179 = vmatpush1.msra.mxu0 0.0
    %180 = vmatprep.subr.mxu0 0.0
    %181 = vmatpush1.msra.mxu0 0.0
    %182 = vmatprep.subr.mxu0 0.0
    %183 = vmatpush1.msra.mxu0 0.0
    %184 = vmatprep.subr.mxu0 0.0
    %185 = vmatpush1.msra.mxu0 0.0
    %186 = vmatprep.subr.mxu0 0.0
    %187 = vmatpush1.msra.mxu0 0.0
    %188 = vmatprep.subr.mxu0 0.0
    %189 = vmatpush1.msra.mxu0 0.0
    %190 = vmatprep.subr.mxu0 0.0
    %191 = vmatpush1.msra.mxu0 0.0
    %192 = vmatprep.subr.mxu0 0.0
    %193 = vmatpush1.msra.mxu0 0.0
    %194 = vmatprep.subr.mxu0 0.0
    %195 = vmatpush1.msra.mxu0 0.0
    %196 = vmatprep.subr.mxu0 0.0
    %197 = vmatpush1.msra.mxu0 0.0
    %198 = vmatprep.mubr.f32.mxu0 0.0
    %199 = vmatmul.mubr.f32.gmra.mrb[0].mxu0 %v87
    %v200 = vpop.f32.mrb[0].mxu0
    %v201 = vadd.f32 0.0, %v200
    %v202 = vpop.f32.mrb[0].mxu0
    %203 = vmatprep.mubr.f32.mxu0 0.0
    %204 = vmatmul.mubr.f32.gmra.mrb[0].mxu0 %v90
    %v205 = vpop.f32.mrb[0].mxu0
    %v206 = vadd.f32 0.0, %v205
    %v207 = vpop.f32.mrb[0].mxu0
    %208 = vmatprep.mubr.f32.mxu0 0.0
    %209 = vmatmul.mubr.f32.gmra.mrb[0].mxu0 %v93
    %v210 = vpop.f32.mrb[0].mxu0
    %v211 = vadd.f32 0.0, %v210
    %v212 = vpop.f32.mrb[0].mxu0
    %213 = vmatprep.mubr.f32.mxu0 0.0
    %214 = vmatmul.mubr.f32.gmra.mrb[0].mxu0 %v96
    %v215 = vpop.f32.mrb[0].mxu0
    %v216 = vadd.f32 0.0, %v215
    %v217 = vpop.f32.mrb[0].mxu0
    %218 = vmatprep.mubr.f32.mxu0 0.0
    %219 = vmatmul.mubr.f32.gmra.mrb[0].mxu0 %v99
    %v220 = vpop.f32.mrb[0].mxu0
    %v221 = vadd.f32 0.0, %v220
    %v222 = vpop.f32.mrb[0].mxu0
    %223 = vmatprep.mubr.f32.mxu0 0.0
    %224 = vmatmul.mubr.f32.gmra.mrb[0].mxu0 %v102
    %v225 = vpop.f32.mrb[0].mxu0
    %v226 = vadd.f32 0.0, %v225
    %v227 = vpop.f32.mrb[0].mxu0
    %228 = vmatprep.mubr.f32.mxu0 0.0
    %229 = vmatmul.mubr.f32.gmra.mrb[0].mxu0 %v105
    %v230 = vpop.f32.mrb[0].mxu0
    %v231 = vadd.f32 0.0, %v230
    %v232 = vpop.f32.mrb[0].mxu0
    %233 = vmatprep.mubr.f32.mxu0 0.0
    %234 = vmatmul.mubr.f32.gmra.mrb[0].mxu0 %v108
    %v235 = vpop.f32.mrb[0].mxu0
    %v236 = vadd.f32 0.0, %v235
    %v237 = vpop.f32.mrb[0].mxu0
    %238 = vmatprep.mubr.f32.mxu0 0.0
    %239 = vmatmul.mubr.f32.gmra.mrb[0].mxu0 %v111
    %v240 = vpop.f32.mrb[0].mxu0
    %v241 = vadd.f32 0.0, %v240
    %v242 = vpop.f32.mrb[0].mxu0
    %243 = vmatprep.mubr.f32.mxu0 0.0
    %244 = vmatmul.mubr.f32.gmra.mrb[0].mxu0 %v114
    %v245 = vpop.f32.mrb[0].mxu0
    %v246 = vadd.f32 0.0, %v245
    %v247 = vpop.f32.mrb[0].mxu0
    %248 = vmatprep.mubr.f32.mxu0 0.0
    %249 = vmatmul.mubr.f32.gmra.mrb[0].mxu0 %v117
    %v250 = vpop.f32.mrb[0].mxu0
    %v251 = vadd.f32 0.0, %v250
    %v252 = vpop.f32.mrb[0].mxu0
    %253 = vmatprep.mubr.f32.mxu0 0.0
    %254 = vmatmul.mubr.f32.gmra.mrb[0].mxu0 %v120
    %v255 = vpop.f32.mrb[0].mxu0
    %v256 = vadd.f32 0.0, %v255
    %v257 = vpop.f32.mrb[0].mxu0
    %258 = vmatprep.mubr.f32.mxu0 0.0
    %259 = vmatmul.mubr.f32.gmra.mrb[0].mxu0 %v123
    %v260 = vpop.f32.mrb[0].mxu0
    %v261 = vadd.f32 0.0, %v260
    %v262 = vpop.f32.mrb[0].mxu0
    %263 = vmatprep.mubr.f32.mxu0 0.0
    %264 = vmatmul.mubr.f32.gmra.mrb[0].mxu0 %v126
    %v265 = vpop.f32.mrb[0].mxu0
    %v266 = vadd.f32 0.0, %v265
    %v267 = vpop.f32.mrb[0].mxu0
    %268 = vmatprep.mubr.f32.mxu0 0.0
    %269 = vmatmul.mubr.f32.gmra.mrb[0].mxu0 %v129
    %v270 = vpop.f32.mrb[0].mxu0
    %v271 = vadd.f32 0.0, %v270
    %v272 = vpop.f32.mrb[0].mxu0
    %273 = vmatprep.mubr.f32.mxu0 0.0
    %274 = vmatmul.mubr.f32.gmra.mrb[0].mxu0 %v132
    %v275 = vpop.f32.mrb[0].mxu0
    %v276 = vadd.f32 0.0, %v275
    %v277 = vpop.f32.mrb[0].mxu0
    %278 = vdwg.mxu0
    %279 = vmatprep.subr.mxu0 0.0
    %280 = vmatpush1.msra.mxu0 %v51
    %281 = vmatprep.subr.mxu0 0.0
    %282 = vmatpush1.msra.mxu0 %v52
    %283 = vmatprep.subr.mxu0 0.0
    %284 = vmatpush1.msra.mxu0 %v53
    %285 = vmatprep.subr.mxu0 0.0
    %286 = vmatpush1.msra.mxu0 %v54
    %287 = vmatprep.subr.mxu0 0.0
    %288 = vmatpush1.msra.mxu0 %v55
    %289 = vmatprep.subr.mxu0 0.0
    %290 = vmatpush1.msra.mxu0 %v56
    %291 = vmatprep.subr.mxu0 0.0
    %292 = vmatpush1.msra.mxu0 %v57
    %293 = vmatprep.subr.mxu0 0.0
    %294 = vmatpush1.msra.mxu0 %v58
    %295 = vmatprep.subr.mxu0 0.0
    %296 = vmatpush1.msra.mxu0 %v59
    %297 = vmatprep.subr.mxu0 0.0
    %298 = vmatpush1.msra.mxu0 %v60
    %299 = vmatprep.subr.mxu0 0.0
    %300 = vmatpush1.msra.mxu0 %v61
    %301 = vmatprep.subr.mxu0 0.0
    %302 = vmatpush1.msra.mxu0 %v62
    %303 = vmatprep.subr.mxu0 0.0
    %304 = vmatpush1.msra.mxu0 %v63
    %305 = vmatprep.subr.mxu0 0.0
    %306 = vmatpush1.msra.mxu0 %v64
    %307 = vmatprep.subr.mxu0 0.0
    %308 = vmatpush1.msra.mxu0 %v65
    %309 = vmatprep.subr.mxu0 0.0
    %310 = vmatpush1.msra.mxu0 %v66
    %311 = vmatprep.subr.mxu0 0.0
    %312 = vmatpush1.msra.mxu0 0.0
    %313 = vmatprep.subr.mxu0 0.0
    %314 = vmatpush1.msra.mxu0 0.0
    %315 = vmatprep.subr.mxu0 0.0
    %316 = vmatpush1.msra.mxu0 0.0
    %317 = vmatprep.subr.mxu0 0.0
    %318 = vmatpush1.msra.mxu0 0.0
    %319 = vmatprep.subr.mxu0 0.0
    %320 = vmatpush1.msra.mxu0 0.0
    %321 = vmatprep.subr.mxu0 0.0
    %322 = vmatpush1.msra.mxu0 0.0
    %323 = vmatprep.subr.mxu0 0.0
    %324 = vmatpush1.msra.mxu0 0.0
    %325 = vmatprep.subr.mxu0 0.0
    %326 = vmatpush1.msra.mxu0 0.0
    %327 = vmatprep.subr.mxu0 0.0
    %328 = vmatpush1.msra.mxu0 0.0
    %329 = vmatprep.subr.mxu0 0.0
    %330 = vmatpush1.msra.mxu0 0.0
    %331 = vmatprep.subr.mxu0 0.0
    %332 = vmatpush1.msra.mxu0 0.0
    %333 = vmatprep.subr.mxu0 0.0
    %334 = vmatpush1.msra.mxu0 0.0
    %335 = vmatprep.subr.mxu0 0.0
    %336 = vmatpush1.msra.mxu0 0.0
    %337 = vmatprep.subr.mxu0 0.0
    %338 = vmatpush1.msra.mxu0 0.0
    %339 = vmatprep.subr.mxu0 0.0
    %340 = vmatpush1.msra.mxu0 0.0
    %341 = vmatprep.subr.mxu0 0.0
    %342 = vmatpush1.msra.mxu0 0.0
    %343 = vmatprep.mubr.f32.mxu0 0.0
    %344 = vmatmul.mubr.f32.gmra.mrb[0].mxu0 %v35
    %v345 = vpop.f32.mrb[0].mxu0
    %v346 = vadd.f32 %v201, %v345
    %v347 = vpop.f32.mrb[0].mxu0
    %348 = vmatprep.mubr.f32.mxu0 0.0
    %349 = vmatmul.mubr.f32.gmra.mrb[0].mxu0 %v36
    %v350 = vpop.f32.mrb[0].mxu0
    %v351 = vadd.f32 %v206, %v350
    %v352 = vpop.f32.mrb[0].mxu0
    %353 = vmatprep.mubr.f32.mxu0 0.0
    %354 = vmatmul.mubr.f32.gmra.mrb[0].mxu0 %v37
    %v355 = vpop.f32.mrb[0].mxu0
    %v356 = vadd.f32 %v211, %v355
    %v357 = vpop.f32.mrb[0].mxu0
    %358 = vmatprep.mubr.f32.mxu0 0.0
    %359 = vmatmul.mubr.f32.gmra.mrb[0].mxu0 %v38
    %v360 = vpop.f32.mrb[0].mxu0
    %v361 = vadd.f32 %v216, %v360
    %v362 = vpop.f32.mrb[0].mxu0
    %363 = vmatprep.mubr.f32.mxu0 0.0
    %364 = vmatmul.mubr.f32.gmra.mrb[0].mxu0 %v39
    %v365 = vpop.f32.mrb[0].mxu0
    %v366 = vadd.f32 %v221, %v365
    %v367 = vpop.f32.mrb[0].mxu0
    %368 = vmatprep.mubr.f32.mxu0 0.0
    %369 = vmatmul.mubr.f32.gmra.mrb[0].mxu0 %v40
    %v370 = vpop.f32.mrb[0].mxu0
    %v371 = vadd.f32 %v226, %v370
    %v372 = vpop.f32.mrb[0].mxu0
    %373 = vmatprep.mubr.f32.mxu0 0.0
    %374 = vmatmul.mubr.f32.gmra.mrb[0].mxu0 %v41
    %v375 = vpop.f32.mrb[0].mxu0
    %v376 = vadd.f32 %v231, %v375
    %v377 = vpop.f32.mrb[0].mxu0
    %378 = vmatprep.mubr.f32.mxu0 0.0
    %379 = vmatmul.mubr.f32.gmra.mrb[0].mxu0 %v42
    %v380 = vpop.f32.mrb[0].mxu0
    %v381 = vadd.f32 %v236, %v380
    %v382 = vpop.f32.mrb[0].mxu0
    %383 = vmatprep.mubr.f32.mxu0 0.0
    %384 = vmatmul.mubr.f32.gmra.mrb[0].mxu0 %v43
    %v385 = vpop.f32.mrb[0].mxu0
    %v386 = vadd.f32 %v241, %v385
    %v387 = vpop.f32.mrb[0].mxu0
    %388 = vmatprep.mubr.f32.mxu0 0.0
    %389 = vmatmul.mubr.f32.gmra.mrb[0].mxu0 %v44
    %v390 = vpop.f32.mrb[0].mxu0
    %v391 = vadd.f32 %v246, %v390
    %v392 = vpop.f32.mrb[0].mxu0
    %393 = vmatprep.mubr.f32.mxu0 0.0
    %394 = vmatmul.mubr.f32.gmra.mrb[0].mxu0 %v45
    %v395 = vpop.f32.mrb[0].mxu0
    %v396 = vadd.f32 %v251, %v395
    %v397 = vpop.f32.mrb[0].mxu0
    %398 = vmatprep.mubr.f32.mxu0 0.0
    %399 = vmatmul.mubr.f32.gmra.mrb[0].mxu0 %v46
    %v400 = vpop.f32.mrb[0].mxu0
    %v401 = vadd.f32 %v256, %v400
    %v402 = vpop.f32.mrb[0].mxu0
    %403 = vmatprep.mubr.f32.mxu0 0.0
    %404 = vmatmul.mubr.f32.gmra.mrb[0].mxu0 %v47
    %v405 = vpop.f32.mrb[0].mxu0
    %v406 = vadd.f32 %v261, %v405
    %v407 = vpop.f32.mrb[0].mxu0
    %408 = vmatprep.mubr.f32.mxu0 0.0
    %409 = vmatmul.mubr.f32.gmra.mrb[0].mxu0 %v48
    %v410 = vpop.f32.mrb[0].mxu0
    %v411 = vadd.f32 %v266, %v410
    %v412 = vpop.f32.mrb[0].mxu0
    %413 = vmatprep.mubr.f32.mxu0 0.0
    %414 = vmatmul.mubr.f32.gmra.mrb[0].mxu0 %v49
    %v415 = vpop.f32.mrb[0].mxu0
    %v416 = vadd.f32 %v271, %v415
    %v417 = vpop.f32.mrb[0].mxu0
    %418 = vmatprep.mubr.f32.mxu0 0.0
    %419 = vmatmul.mubr.f32.gmra.mrb[0].mxu0 %v50
    %v420 = vpop.f32.mrb[0].mxu0
    %v421 = vadd.f32 %v276, %v420
    %v422 = vpop.f32.mrb[0].mxu0
    %423 = vdwg.mxu0
    %v424 = vld [vmem:[%s4] sm:$0x1]
    %v426 = vlaneseq
    %v427 = vshrl.u32 %v426, 7
    %v428 = vsub.s32 0, %v427
    %v429 = vrot.slane %v424, %v428
    %v431 = vadd.f32 %v346, %v429
    %v432 = vadd.f32 %v351, %v429
    %v433 = vadd.f32 %v356, %v429
    %v434 = vadd.f32 %v361, %v429
    %v435 = vadd.f32 %v366, %v429
    %v436 = vadd.f32 %v371, %v429
    %v437 = vadd.f32 %v376, %v429
    %v438 = vadd.f32 %v381, %v429
    %v439 = vadd.f32 %v386, %v429
    %v440 = vadd.f32 %v391, %v429
    %v441 = vadd.f32 %v396, %v429
    %v442 = vadd.f32 %v401, %v429
    %v443 = vadd.f32 %v406, %v429
    %v444 = vadd.f32 %v411, %v429
    %v445 = vadd.f32 %v416, %v429
    %v446 = vadd.f32 %v421, %v429
    %v447 = vadd.f32 %v431, %v35
    %v448 = vadd.f32 %v432, %v36
    %v449 = vadd.f32 %v433, %v37
    %v450 = vadd.f32 %v434, %v38
    %v451 = vadd.f32 %v435, %v39
    %v452 = vadd.f32 %v436, %v40
    %v453 = vadd.f32 %v437, %v41
    %v454 = vadd.f32 %v438, %v42
    %v455 = vadd.f32 %v439, %v43
    %v456 = vadd.f32 %v440, %v44
    %v457 = vadd.f32 %v441, %v45
    %v458 = vadd.f32 %v442, %v46
    %v459 = vadd.f32 %v443, %v47
    %v460 = vadd.f32 %v444, %v48
    %v461 = vadd.f32 %v445, %v49
    %v462 = vadd.f32 %v446, %v50
    %v463 = vmax.f32 %v447, 0.0
    %v464 = vmax.f32 %v448, 0.0
    %v465 = vmax.f32 %v449, 0.0
    %v466 = vmax.f32 %v450, 0.0
    %v467 = vmax.f32 %v451, 0.0
    %v468 = vmax.f32 %v452, 0.0
    %v469 = vmax.f32 %v453, 0.0
    %v470 = vmax.f32 %v454, 0.0
    %v471 = vmax.f32 %v455, 0.0
    %v472 = vmax.f32 %v456, 0.0
    %v473 = vmax.f32 %v457, 0.0
    %v474 = vmax.f32 %v458, 0.0
    %v475 = vmax.f32 %v459, 0.0
    %v476 = vmax.f32 %v460, 0.0
    %v477 = vmax.f32 %v461, 0.0
    %v478 = vmax.f32 %v462, 0.0
    %479 = vst [vmem:[#allocation5] sm:$0xff] %v463
    %480 = vst [vmem:[#allocation5 + $0x8] sm:$0xff] %v464
    %481 = vst [vmem:[#allocation5 + $0x10] sm:$0xff] %v465
    %482 = vst [vmem:[#allocation5 + $0x18] sm:$0xff] %v466
    %483 = vst [vmem:[#allocation5 + $0x20] sm:$0xff] %v467
    %484 = vst [vmem:[#allocation5 + $0x28] sm:$0xff] %v468
    %485 = vst [vmem:[#allocation5 + $0x30] sm:$0xff] %v469
    %486 = vst [vmem:[#allocation5 + $0x38] sm:$0xff] %v470
    %487 = vst [vmem:[#allocation5 + $0x40] sm:$0xff] %v471
    %488 = vst [vmem:[#allocation5 + $0x48] sm:$0xff] %v472
    %489 = vst [vmem:[#allocation5 + $0x50] sm:$0xff] %v473
    %490 = vst [vmem:[#allocation5 + $0x58] sm:$0xff] %v474
    %491 = vst [vmem:[#allocation5 + $0x60] sm:$0xff] %v475
    %492 = vst [vmem:[#allocation5 + $0x68] sm:$0xff] %v476
    %493 = vst [vmem:[#allocation5 + $0x70] sm:$0xff] %v477
    %494 = vst [vmem:[#allocation5 + $0x78] sm:$0xff] %v478
    // Predicated region
    $region26: #{tpu_custom_call.1} parent=1 // pred_check
      _
    $region27: #{tpu_custom_call.1} parent=1 // pred_check_branch
      %496 = sbr.rel (0) target = $region29
    $region28: #{tpu_custom_call.1} parent=1 // pred_region
      %s498 = ssub.s32 2048, 2048
      %499 = vsyncadd [#allocation4], %s498
      %s500 = sshll.u32 [#allocation5], 4
      %s501 = int_to_ptr.vmem [resolvable:$true] %s500
      %506 = dma.vmem_to_hbm [thread:$0]  %s501, 2048, %s5, [#allocation4], 128, 128, 8
    $region29: #{tpu_custom_call.1} parent=1 // pred_fallthru
      _
    // Predicated region
    $region30: #{tpu_custom_call.1} parent=1 // pred_check
      _
    $region31: #{tpu_custom_call.1} parent=1 // pred_check_branch
      %508 = sbr.rel (0) target = $region33
    $region32: #{tpu_custom_call.1} parent=1 // pred_region
      %509 = dma.done [#allocation4], 2048
    $region33: #{tpu_custom_call.1} parent=1 // pred_fallthru
      _
    %510 = vsyncpa [#allocation3], 1
    %511 = vsyncpa [#allocation4], 1

</llo_original>
